<compile_context>
chip_gen: v6e
topology: v6e:2x2x1
jax: 0.10.0
libtpu: 0.0.40
codegen_flags: <defaults>
</compile_context>

<pallas_src>
import functools

import jax
import jax.numpy as jnp
from jax.experimental import pallas as pl
from jax.experimental.pallas import tpu as pltpu

RRELU_SLOPE = (1.0 / 8.0 + 1.0 / 3.0) / 2.0  # 11/48, eval-mode F.rrelu


def _rrelu(v):
    return jnp.where(v >= 0, v, RRELU_SLOPE * v)


def _round_up(n, m):
    return ((n + m - 1) // m) * m


# ---------------------------------------------------------------------------
# Kernel: fully fused 3-layer MLP on one batch tile.
# All feature dims are lane-aligned (multiples of 128); matmul operands are
# bf16 with f32 MXU accumulation; bias add + rrelu stay in f32.
# ---------------------------------------------------------------------------
def mlp_kernel(x_ref, w1_ref, b1_ref, w2_ref, b2_ref, w3_ref, b3_ref, o_ref):
    # Layer 1: (TM, in_p) @ (in_p, h1_p) + (1, h1_p), rrelu
    y1 = jnp.dot(x_ref[...], w1_ref[...],
                 preferred_element_type=jnp.float32) + b1_ref[...]
    y1 = _rrelu(y1).astype(jnp.bfloat16)
    # Layer 2: (TM, h1_p) @ (h1_p, h2_p) + (1, h2_p), rrelu
    y2 = jnp.dot(y1, w2_ref[...],
                 preferred_element_type=jnp.float32) + b2_ref[...]
    y2 = _rrelu(y2).astype(jnp.bfloat16)
    # Output layer: (TM, h2_p) @ (h2_p, out_p) + (1, out_p), rrelu
    y3 = jnp.dot(y2, w3_ref[...],
                 preferred_element_type=jnp.float32) + b3_ref[...]
    o_ref[...] = _rrelu(y3).astype(o_ref.dtype)


# ---------------------------------------------------------------------------
# One-time parameter preprocessing (call at model setup, NOT per forward).
# Zero-padding feature dims is mathematically exact: padded input columns hit
# zero weight rows, padded output columns have zero weights/bias and are
# sliced off after the kernel.
# ---------------------------------------------------------------------------
def preprocess_params(w1, b1, w2, b2, w3, b3):
    in_size, h1 = w1.shape
    h2 = w2.shape[1]
    out_size = w3.shape[1]

    in_p = _round_up(in_size, 128)
    h1_p = _round_up(h1, 128)
    h2_p = _round_up(h2, 128)
    out_p = _round_up(out_size, 128)

    w1p = jnp.pad(w1, ((0, in_p - in_size), (0, h1_p - h1))).astype(jnp.bfloat16)
    w2p = jnp.pad(w2, ((0, h1_p - h1), (0, h2_p - h2))).astype(jnp.bfloat16)
    w3p = jnp.pad(w3, ((0, h2_p - h2), (0, out_p - out_size))).astype(jnp.bfloat16)
    b1p = jnp.pad(b1, ((0, 0), (0, h1_p - h1))).astype(jnp.float32)
    b2p = jnp.pad(b2, ((0, 0), (0, h2_p - h2))).astype(jnp.float32)
    b3p = jnp.pad(b3, ((0, 0), (0, out_p - out_size))).astype(jnp.float32)
    return (w1p, b1p, w2p, b2p, w3p, b3p)


def _choose_batch_tile(b_pad8, max_tm=1024):
    """Pick the batch tile (multiple of 8).

    - Guarantees >= 2 grid steps whenever b_pad8 > 8 so v7x can shard the
      "parallel" batch axis across its two TensorCores.
    - Caps at 1024 rows: amortizes the ~0.35 us per-grid-step overhead while
      keeping the working set (incl. f32 y1/y2 intermediates) ~8 MiB.
    - Rounding to half the batch bounds padding overshoot to <= 8 rows for
      medium batches (vs. up to a full tile with a fixed tile size).
    """
    if b_pad8 <= 8:
        return b_pad8
    half = _round_up(-(-b_pad8 // 2), 8)
    return min(max_tm, half)


def _mlp_pallas_padded(x, w1p, b1p, w2p, b2p, w3p, b3p):
    """Run the fused MLP; returns the lane-padded (b_pad, out_p) f32 output."""
    B, in_size = x.shape
    in_p, h1_p = w1p.shape
    h2_p = w2p.shape[1]
    out_p = w3p.shape[1]

    b_pad8 = _round_up(B, 8)
    tm = _choose_batch_tile(b_pad8)
    steps = -(-b_pad8 // tm)
    b_pad = steps * tm

    # Only the activations are padded/cast per call (weights were preprocessed
    # once at setup).
    xp = jnp.pad(x, ((0, b_pad - B), (0, in_p - in_size))).astype(jnp.bfloat16)

    def resident(shape):
        # Same block every grid step -> stays in VMEM, no re-DMA.
        return pl.BlockSpec(shape, lambda i: (0, 0))

    return pl.pallas_call(
        mlp_kernel,
        out_shape=jax.ShapeDtypeStruct((b_pad, out_p), jnp.float32),
        grid=(steps,),
        in_specs=[
            pl.BlockSpec((tm, in_p), lambda i: (i, 0)),   # x streams over batch
            resident((in_p, h1_p)), resident((1, h1_p)),
            resident((h1_p, h2_p)), resident((1, h2_p)),
            resident((h2_p, out_p)), resident((1, out_p)),
        ],
        out_specs=pl.BlockSpec((tm, out_p), lambda i: (i, 0)),
        compiler_params=pltpu.CompilerParams(
            dimension_semantics=("parallel",),
            vmem_limit_bytes=32 << 20,
        ),
    )(xp, w1p, b1p, w2p, b2p, w3p, b3p)


def make_neural_net_forward(w1, b1, w2, b2, w3, b3):
    """Pre-pads/casts the weights once and returns a jitted forward(x)."""
    out_size = w3.shape[1]
    params = preprocess_params(w1, b1, w2, b2, w3, b3)

    @jax.jit
    def _jit_forward(x, params):
        out_padded = _mlp_pallas_padded(x, *params)
        # Match the PyTorch module's (B, 81) output. Callers that can accept
        # the lane-padded (B, 128) slab should use _mlp_pallas_padded directly
        # to skip this copy.
        return out_padded[:x.shape[0], :out_size]

    return lambda x: _jit_forward(x, params)


# ---------------------------------------------------------------------------
# Reference / test harness
# ---------------------------------------------------------------------------
def init_linear(key, in_f, out_f):
    # Mimic PyTorch nn.Linear default init: U(-1/sqrt(in_f), 1/sqrt(in_f)).
    kw, kb = jax.random.split(key)
    bound = 1.0 / (in_f ** 0.5)
    w = jax.random.uniform(kw, (in_f, out_f), jnp.float32, -bound, bound)
    b = jax.random.uniform(kb, (1, out_f), jnp.float32, -bound, bound)
    return w, b


def reference_forward(x, w1, b1, w2, b2, w3, b3):
    y1 = _rrelu(x @ w1 + b1)
    y2 = _rrelu(y1 @ w2 + b2)
    return _rrelu(y2 @ w3 + b3)


if __name__ == "__main__":
    key = jax.random.PRNGKey(0)
    k_x, k_x2, k1, k2, k3 = jax.random.split(key, 5)

    in_size, h1, h2, out_size = 81, 500, 200, 81  # Sudoku: 81-cell board in/out

    w1, b1 = init_linear(k1, in_size, h1)
    w2, b2 = init_linear(k2, h1, h2)
    w3, b3 = init_linear(k3, h2, out_size)

    forward = make_neural_net_forward(w1, b1, w2, b2, w3, b3)  # pads weights once

    # Case 1: tiny batch (the real Sudoku use case) -> single grid step.
    x = jax.random.normal(k_x, (8, in_size), jnp.float32)
    out = jax.block_until_ready(forward(x))
    ref = reference_forward(x, w1, b1, w2, b2, w3, b3)
    assert out.shape == (8, out_size)
    max_err = float(jnp.max(jnp.abs(out - ref)))
    assert max_err < 2e-2, f"mismatch vs reference (B=8), max abs err {max_err}"

    # Case 2: batch that exercises the multi-step (>=2 tiles) grid path.
    x2 = jax.random.normal(k_x2, (24, in_size), jnp.float32)
    out2 = jax.block_until_ready(forward(x2))
    ref2 = reference_forward(x2, w1, b1, w2, b2, w3, b3)
    assert out2.shape == (24, out_size)
    max_err2 = float(jnp.max(jnp.abs(out2 - ref2)))
    assert max_err2 < 2e-2, f"mismatch vs reference (B=24), max abs err {max_err2}"

    print("KERNEL_OK")
</pallas_src>

<mosaic_0001>
module attributes {stable_mosaic.version = 11 : i64} {
  func.func @mlp_kernel(%arg0: i32, %arg1: memref<8x128xbf16, #tpu.memory_space<vmem>>, %arg2: memref<128x512xbf16, #tpu.memory_space<vmem>>, %arg3: memref<1x512xf32, #tpu.memory_space<vmem>>, %arg4: memref<512x256xbf16, #tpu.memory_space<vmem>>, %arg5: memref<1x256xf32, #tpu.memory_space<vmem>>, %arg6: memref<256x128xbf16, #tpu.memory_space<vmem>>, %arg7: memref<1x128xf32, #tpu.memory_space<vmem>>, %arg8: memref<8x128xf32, #tpu.memory_space<vmem>>) attributes {dimension_semantics = [#tpu.dimension_semantics<parallel>], iteration_bounds = array<i64: 1>, scalar_prefetch = 0 : i64, scratch_operands = 0 : i64, tpu.core_type = #tpu.core_type<tc>, window_params = [{transform_indices = @transform_0, window_bounds = array<i64: 8, 128>}, {pipeline_mode = #tpu.pipeline_mode<synchronous>, transform_indices = @transform_1, window_bounds = array<i64: 128, 512>}, {pipeline_mode = #tpu.pipeline_mode<synchronous>, transform_indices = @transform_2, window_bounds = array<i64: 1, 512>}, {pipeline_mode = #tpu.pipeline_mode<synchronous>, transform_indices = @transform_3, window_bounds = array<i64: 512, 256>}, {pipeline_mode = #tpu.pipeline_mode<synchronous>, transform_indices = @transform_4, window_bounds = array<i64: 1, 256>}, {pipeline_mode = #tpu.pipeline_mode<synchronous>, transform_indices = @transform_5, window_bounds = array<i64: 256, 128>}, {pipeline_mode = #tpu.pipeline_mode<synchronous>, transform_indices = @transform_6, window_bounds = array<i64: 1, 128>}, {transform_indices = @transform_7, window_bounds = array<i64: 8, 128>}]} {
    %c0 = arith.constant 0 : index
    %c0_0 = arith.constant 0 : index
    %0 = vector.load %arg1[%c0, %c0_0] : memref<8x128xbf16, #tpu.memory_space<vmem>>, vector<8x128xbf16>
    %c0_1 = arith.constant 0 : index
    %c0_2 = arith.constant 0 : index
    %1 = vector.load %arg2[%c0_1, %c0_2] : memref<128x512xbf16, #tpu.memory_space<vmem>>, vector<128x512xbf16>
    %cst = arith.constant dense<0.000000e+00> : vector<8x512xf32>
    %2 = tpu.matmul %0, %1, %cst {dimension_numbers = #tpu.dot_dimension_numbers<[1], [0], [0], [1], [0, 0, 1, 1], [], []>} : vector<8x128xbf16>, vector<128x512xbf16>, vector<8x512xf32> -> vector<8x512xf32>
    %c0_3 = arith.constant 0 : index
    %c0_4 = arith.constant 0 : index
    %3 = vector.load %arg3[%c0_3, %c0_4] : memref<1x512xf32, #tpu.memory_space<vmem>>, vector<1x512xf32>
    %4 = vector.broadcast %3 : vector<1x512xf32> to vector<8x512xf32>
    %5 = arith.addf %2, %4 : vector<8x512xf32>
    %cst_5 = arith.constant 0.000000e+00 : f32
    %6 = vector.broadcast %cst_5 : f32 to vector<8x512xf32>
    %7 = arith.cmpf oge, %5, %6 : vector<8x512xf32>
    %cst_6 = arith.constant 0.229166672 : f32
    %8 = vector.broadcast %cst_6 : f32 to vector<8x512xf32>
    %9 = arith.mulf %8, %5 : vector<8x512xf32>
    %10 = arith.select %7, %5, %9 : vector<8x512xi1>, vector<8x512xf32>
    %11 = arith.truncf %10 : vector<8x512xf32> to vector<8x512xbf16>
    %c0_7 = arith.constant 0 : index
    %c0_8 = arith.constant 0 : index
    %12 = vector.load %arg4[%c0_7, %c0_8] : memref<512x256xbf16, #tpu.memory_space<vmem>>, vector<512x256xbf16>
    %cst_9 = arith.constant dense<0.000000e+00> : vector<8x256xf32>
    %13 = tpu.matmul %11, %12, %cst_9 {dimension_numbers = #tpu.dot_dimension_numbers<[1], [0], [0], [1], [0, 0, 1, 1], [], []>} : vector<8x512xbf16>, vector<512x256xbf16>, vector<8x256xf32> -> vector<8x256xf32>
    %c0_10 = arith.constant 0 : index
    %c0_11 = arith.constant 0 : index
    %14 = vector.load %arg5[%c0_10, %c0_11] : memref<1x256xf32, #tpu.memory_space<vmem>>, vector<1x256xf32>
    %15 = vector.broadcast %14 : vector<1x256xf32> to vector<8x256xf32>
    %16 = arith.addf %13, %15 : vector<8x256xf32>
    %cst_12 = arith.constant 0.000000e+00 : f32
    %17 = vector.broadcast %cst_12 : f32 to vector<8x256xf32>
    %18 = arith.cmpf oge, %16, %17 : vector<8x256xf32>
    %cst_13 = arith.constant 0.229166672 : f32
    %19 = vector.broadcast %cst_13 : f32 to vector<8x256xf32>
    %20 = arith.mulf %19, %16 : vector<8x256xf32>
    %21 = arith.select %18, %16, %20 : vector<8x256xi1>, vector<8x256xf32>
    %22 = arith.truncf %21 : vector<8x256xf32> to vector<8x256xbf16>
    %c0_14 = arith.constant 0 : index
    %c0_15 = arith.constant 0 : index
    %23 = vector.load %arg6[%c0_14, %c0_15] : memref<256x128xbf16, #tpu.memory_space<vmem>>, vector<256x128xbf16>
    %cst_16 = arith.constant dense<0.000000e+00> : vector<8x128xf32>
    %24 = tpu.matmul %22, %23, %cst_16 {dimension_numbers = #tpu.dot_dimension_numbers<[1], [0], [0], [1], [0, 0, 1, 1], [], []>} : vector<8x256xbf16>, vector<256x128xbf16>, vector<8x128xf32> -> vector<8x128xf32>
    %c0_17 = arith.constant 0 : index
    %c0_18 = arith.constant 0 : index
    %25 = vector.load %arg7[%c0_17, %c0_18] : memref<1x128xf32, #tpu.memory_space<vmem>>, vector<1x128xf32>
    %26 = vector.broadcast %25 : vector<1x128xf32> to vector<8x128xf32>
    %27 = arith.addf %24, %26 : vector<8x128xf32>
    %cst_19 = arith.constant 0.000000e+00 : f32
    %28 = vector.broadcast %cst_19 : f32 to vector<8x128xf32>
    %29 = arith.cmpf oge, %27, %28 : vector<8x128xf32>
    %cst_20 = arith.constant 0.229166672 : f32
    %30 = vector.broadcast %cst_20 : f32 to vector<8x128xf32>
    %31 = arith.mulf %30, %27 : vector<8x128xf32>
    %32 = arith.select %29, %27, %31 : vector<8x128xi1>, vector<8x128xf32>
    %c0_21 = arith.constant 0 : index
    %c0_22 = arith.constant 0 : index
    %33 = vector.load %arg8[%c0_21, %c0_22] : memref<8x128xf32, #tpu.memory_space<vmem>>, vector<8x128xf32>
    tpu.vector_store %arg8[%c0_21, %c0_22], %32 {strides = array<i32>} : memref<8x128xf32, #tpu.memory_space<vmem>>, vector<8x128xf32>,
    return
  }
  func.func @transform_0(%arg0: i32) -> (i32, i32) {
    %c0_i32 = arith.constant 0 : i32
    %c0_i32_0 = arith.constant 0 : i32
    return %arg0, %c0_i32 : i32, i32
  }
  func.func @transform_1(%arg0: i32) -> (i32, i32) {
    %c0_i32 = arith.constant 0 : i32
    %c0_i32_0 = arith.constant 0 : i32
    %c0_i32_1 = arith.constant 0 : i32
    return %c0_i32, %c0_i32_0 : i32, i32
  }
  func.func @transform_2(%arg0: i32) -> (i32, i32) {
    %c0_i32 = arith.constant 0 : i32
    %c0_i32_0 = arith.constant 0 : i32
    %c0_i32_1 = arith.constant 0 : i32
    return %c0_i32, %c0_i32_0 : i32, i32
  }
  func.func @transform_3(%arg0: i32) -> (i32, i32) {
    %c0_i32 = arith.constant 0 : i32
    %c0_i32_0 = arith.constant 0 : i32
    %c0_i32_1 = arith.constant 0 : i32
    return %c0_i32, %c0_i32_0 : i32, i32
  }
  func.func @transform_4(%arg0: i32) -> (i32, i32) {
    %c0_i32 = arith.constant 0 : i32
    %c0_i32_0 = arith.constant 0 : i32
    %c0_i32_1 = arith.constant 0 : i32
    return %c0_i32, %c0_i32_0 : i32, i32
  }
  func.func @transform_5(%arg0: i32) -> (i32, i32) {
    %c0_i32 = arith.constant 0 : i32
    %c0_i32_0 = arith.constant 0 : i32
    %c0_i32_1 = arith.constant 0 : i32
    return %c0_i32, %c0_i32_0 : i32, i32
  }
  func.func @transform_6(%arg0: i32) -> (i32, i32) {
    %c0_i32 = arith.constant 0 : i32
    %c0_i32_0 = arith.constant 0 : i32
    %c0_i32_1 = arith.constant 0 : i32
    return %c0_i32, %c0_i32_0 : i32, i32
  }
  func.func @transform_7(%arg0: i32) -> (i32, i32) {
    %c0_i32 = arith.constant 0 : i32
    %c0_i32_0 = arith.constant 0 : i32
    return %arg0, %c0_i32 : i32, i32
  }
}

</mosaic_0001>

<llo_original>
// kernel: _jit_forward.1
$region0: #{_jit_forward.1}
  #allocation0 [shape = 'u32[]', space=smem, size = 0x4, offset = 0x4, fixed_abs, tag = 'smem constant byte address 0x4 - core index']
  #allocation1 [shape = 'u32[144,128]{1,0:T(1,128)}', space=vmem, size = 0x12000, scoped, tag = 'internal scratch']
  %s0 = inlined_call_operand.vmem [shape: bf16[8,128], index: 0, kind: input, shape index: {}]
  %s1 = inlined_call_operand.hbm [shape: bf16[128,512], index: 1, kind: input, shape index: {}]
  %s2 = inlined_call_operand.vmem [shape: f32[1,512], index: 2, kind: input, shape index: {}]
  %s3 = inlined_call_operand.hbm [shape: bf16[512,256], index: 3, kind: input, shape index: {}]
  %s4 = inlined_call_operand.vmem [shape: f32[1,256], index: 4, kind: input, shape index: {}]
  %s5 = inlined_call_operand.hbm [shape: bf16[256,128], index: 5, kind: input, shape index: {}]
  %s6 = inlined_call_operand.vmem [shape: f32[1,128], index: 6, kind: input, shape index: {}]
  %s7 = inlined_call_operand.hbm [shape: f32[8,128], index: 7, kind: output, shape index: {}]
  %s8 = sld [smem:[#allocation0]]
  $region50: #{_jit_forward.1} parent=0
    _
  %s10 = ssub.s32 1, %s8
  %s11 = scalar_select 0, %s10, %s8
  $region1: #{_jit_forward.1} parent=0
    #allocation2 [shape = 'u8[131072]{0}', space=vmem, size = 0x20000, scoped, tag = 'input window, operand 1, single buffered']
    #allocation3 [shape = 's32[1]{0}', space=sflag, size = 0x4, scoped, tag = 'scoped memory for _jit_forward.1']
    #allocation4 [shape = 's32[1]{0}', space=sflag, size = 0x4, scoped, tag = 'scoped memory for _jit_forward.1']
    #allocation5 [shape = 'u8[262144]{0}', space=vmem, size = 0x40000, scoped, tag = 'input window, operand 3, single buffered']
    #allocation6 [shape = 's32[1]{0}', space=sflag, size = 0x4, scoped, tag = 'scoped memory for _jit_forward.1']
    #allocation7 [shape = 'u8[65536]{0}', space=vmem, size = 0x10000, scoped, tag = 'input window, operand 5, single buffered']
    #allocation8 [shape = 'u8[4096]{0}', space=vmem, size = 0x1000, scoped, tag = 'output window, operand 0, single buffered']
    %12 = vsyncpa [#allocation3], 0
    %13 = vsyncpa [#allocation6], 0
    %14 = vsyncpa [#allocation4], 0
    // Predicated region
    $region2: #{_jit_forward.1} parent=1 // pred_check
      _
    $region3: #{_jit_forward.1} parent=1 // pred_check_branch
      %16 = sbr.rel (0) target = $region5
    $region4: #{_jit_forward.1} parent=1 // pred_region
      _
    $region5: #{_jit_forward.1} parent=1 // pred_fallthru
      _
    // Predicated region
    $region6: #{_jit_forward.1} parent=1 // pred_check
      _
    $region7: #{_jit_forward.1} parent=1 // pred_check_branch
      %18 = sbr.rel (0) target = $region9
    $region8: #{_jit_forward.1} parent=1 // pred_region
      %s20 = ssub.s32 4096, 4096
      %21 = vsyncadd [#allocation3], %s20
      %s22 = sshll.u32 [#allocation2], 4
      %s23 = int_to_ptr.vmem [resolvable:$true] %s22
      %28 = dma.hbm_to_vmem [thread:$0]  %s1, 4096, %s23, [#allocation3], 256, 256, 16
    $region9: #{_jit_forward.1} parent=1 // pred_fallthru
      _
    // Predicated region
    $region10: #{_jit_forward.1} parent=1 // pred_check
      _
    $region11: #{_jit_forward.1} parent=1 // pred_check_branch
      %30 = sbr.rel (0) target = $region13
    $region12: #{_jit_forward.1} parent=1 // pred_region
      _
    $region13: #{_jit_forward.1} parent=1 // pred_fallthru
      _
    // Predicated region
    $region14: #{_jit_forward.1} parent=1 // pred_check
      _
    $region15: #{_jit_forward.1} parent=1 // pred_check_branch
      %32 = sbr.rel (0) target = $region17
    $region16: #{_jit_forward.1} parent=1 // pred_region
      %s34 = ssub.s32 8192, 8192
      %35 = vsyncadd [#allocation6], %s34
      %s36 = sshll.u32 [#allocation5], 4
      %s37 = int_to_ptr.vmem [resolvable:$true] %s36
      %42 = dma.hbm_to_vmem [thread:$0]  %s3, 8192, %s37, [#allocation6], 128, 128, 8
    $region17: #{_jit_forward.1} parent=1 // pred_fallthru
      _
    // Predicated region
    $region18: #{_jit_forward.1} parent=1 // pred_check
      _
    $region19: #{_jit_forward.1} parent=1 // pred_check_branch
      %44 = sbr.rel (0) target = $region21
    $region20: #{_jit_forward.1} parent=1 // pred_region
      _
    $region21: #{_jit_forward.1} parent=1 // pred_fallthru
      _
    // Predicated region
    $region22: #{_jit_forward.1} parent=1 // pred_check
      _
    $region23: #{_jit_forward.1} parent=1 // pred_check_branch
      %46 = sbr.rel (0) target = $region25
    $region24: #{_jit_forward.1} parent=1 // pred_region
      %s48 = ssub.s32 2048, 2048
      %49 = vsyncadd [#allocation6], %s48
      %s50 = sshll.u32 [#allocation7], 4
      %s51 = int_to_ptr.vmem [resolvable:$true] %s50
      %56 = dma.hbm_to_vmem [thread:$0]  %s5, 2048, %s51, [#allocation6], 64, 64, 4
    $region25: #{_jit_forward.1} parent=1 // pred_fallthru
      _
    // Predicated region
    $region26: #{_jit_forward.1} parent=1 // pred_check
      _
    $region27: #{_jit_forward.1} parent=1 // pred_check_branch
      %58 = sbr.rel (0) target = $region29
    $region28: #{_jit_forward.1} parent=1 // pred_region
      _
    $region29: #{_jit_forward.1} parent=1 // pred_fallthru
      _
    // Predicated region
    $region30: #{_jit_forward.1} parent=1 // pred_check
      _
    $region31: #{_jit_forward.1} parent=1 // pred_check_branch
      %60 = sbr.rel (0) target = $region33
    $region32: #{_jit_forward.1} parent=1 // pred_region
      %61 = dma.done [#allocation3], 4096
    $region33: #{_jit_forward.1} parent=1 // pred_fallthru
      _
    // Predicated region
    $region34: #{_jit_forward.1} parent=1 // pred_check
      _
    $region35: #{_jit_forward.1} parent=1 // pred_check_branch
      %63 = sbr.rel (0) target = $region37
    $region36: #{_jit_forward.1} parent=1 // pred_region
      %64 = dma.done [#allocation6], 8192
    $region37: #{_jit_forward.1} parent=1 // pred_fallthru
      _
    // Predicated region
    $region38: #{_jit_forward.1} parent=1 // pred_check
      _
    $region39: #{_jit_forward.1} parent=1 // pred_check_branch
      %66 = sbr.rel (0) target = $region41
    $region40: #{_jit_forward.1} parent=1 // pred_region
      %67 = dma.done [#allocation6], 2048
    $region41: #{_jit_forward.1} parent=1 // pred_fallthru
      _
    %v69 = vld [vmem:[%s0] sm:$0xf]
    %v70 = vld [vmem:[#allocation2] sm:$0xff]
    %v71 = vld [vmem:[#allocation2 + $0x8] sm:$0xff]
    %v72 = vld [vmem:[#allocation2 + $0x10] sm:$0xff]
    %v73 = vld [vmem:[#allocation2 + $0x18] sm:$0xff]
    %v74 = vld [vmem:[#allocation2 + $0x20] sm:$0xff]
    %v75 = vld [vmem:[#allocation2 + $0x28] sm:$0xff]
    %v76 = vld [vmem:[#allocation2 + $0x30] sm:$0xff]
    %v77 = vld [vmem:[#allocation2 + $0x38] sm:$0xff]
    %v78 = vld [vmem:[#allocation2 + $0x40] sm:$0xff]
    %v79 = vld [vmem:[#allocation2 + $0x48] sm:$0xff]
    %v80 = vld [vmem:[#allocation2 + $0x50] sm:$0xff]
    %v81 = vld [vmem:[#allocation2 + $0x58] sm:$0xff]
    %v82 = vld [vmem:[#allocation2 + $0x60] sm:$0xff]
    %v83 = vld [vmem:[#allocation2 + $0x68] sm:$0xff]
    %v84 = vld [vmem:[#allocation2 + $0x70] sm:$0xff]
    %v85 = vld [vmem:[#allocation2 + $0x78] sm:$0xff]
    %v86 = vld [vmem:[#allocation2 + $0x80] sm:$0xff]
    %v87 = vld [vmem:[#allocation2 + $0x88] sm:$0xff]
    %v88 = vld [vmem:[#allocation2 + $0x90] sm:$0xff]
    %v89 = vld [vmem:[#allocation2 + $0x98] sm:$0xff]
    %v90 = vld [vmem:[#allocation2 + $0xa0] sm:$0xff]
    %v91 = vld [vmem:[#allocation2 + $0xa8] sm:$0xff]
    %v92 = vld [vmem:[#allocation2 + $0xb0] sm:$0xff]
    %v93 = vld [vmem:[#allocation2 + $0xb8] sm:$0xff]
    %v94 = vld [vmem:[#allocation2 + $0xc0] sm:$0xff]
    %v95 = vld [vmem:[#allocation2 + $0xc8] sm:$0xff]
    %v96 = vld [vmem:[#allocation2 + $0xd0] sm:$0xff]
    %v97 = vld [vmem:[#allocation2 + $0xd8] sm:$0xff]
    %v98 = vld [vmem:[#allocation2 + $0xe0] sm:$0xff]
    %v99 = vld [vmem:[#allocation2 + $0xe8] sm:$0xff]
    %v100 = vld [vmem:[#allocation2 + $0xf0] sm:$0xff]
    %v101 = vld [vmem:[#allocation2 + $0xf8] sm:$0xff]
    %v102 = vld [vmem:[%s2] sm:$0xf]
    %v104 = vlaneseq
    %v105 = vshrl.u32 %v104, 7
    %v106 = vsub.s32 0, %v105
    %v107 = vrot.slane %v102, %v106
    %v108 = vlaneseq
    %v109 = vshrl.u32 %v108, 7
    %v110 = vsub.s32 1, %v109
    %v111 = vrot.slane %v102, %v110
    %v112 = vlaneseq
    %v113 = vshrl.u32 %v112, 7
    %v114 = vsub.s32 2, %v113
    %v115 = vrot.slane %v102, %v114
    %v116 = vlaneseq
    %v117 = vshrl.u32 %v116, 7
    %v118 = vsub.s32 3, %v117
    %v119 = vrot.slane %v102, %v118
    %v156 = vunpack.c.l.b16 %v70
    %v157 = vunpack.c.h.b16 %v70
    %v158 = vunpack.c.l.b16 %v71
    %v159 = vunpack.c.h.b16 %v71
    %v160 = vunpack.c.l.b16 %v72
    %v161 = vunpack.c.h.b16 %v72
    %v162 = vunpack.c.l.b16 %v73
    %v163 = vunpack.c.h.b16 %v73
    %v164 = vunpack.c.l.b16 %v74
    %v165 = vunpack.c.h.b16 %v74
    %v166 = vunpack.c.l.b16 %v75
    %v167 = vunpack.c.h.b16 %v75
    %v168 = vunpack.c.l.b16 %v76
    %v169 = vunpack.c.h.b16 %v76
    %v170 = vunpack.c.l.b16 %v77
    %v171 = vunpack.c.h.b16 %v77
    %v172 = vunpack.c.l.b16 %v78
    %v173 = vunpack.c.h.b16 %v78
    %v174 = vunpack.c.l.b16 %v79
    %v175 = vunpack.c.h.b16 %v79
    %v176 = vunpack.c.l.b16 %v80
    %v177 = vunpack.c.h.b16 %v80
    %v178 = vunpack.c.l.b16 %v81
    %v179 = vunpack.c.h.b16 %v81
    %v180 = vunpack.c.l.b16 %v82
    %v181 = vunpack.c.h.b16 %v82
    %v182 = vunpack.c.l.b16 %v83
    %v183 = vunpack.c.h.b16 %v83
    %v184 = vunpack.c.l.b16 %v84
    %v185 = vunpack.c.h.b16 %v84
    %v186 = vunpack.c.l.b16 %v85
    %v187 = vunpack.c.h.b16 %v85
    %v188 = vunpack.c.l.b16 %v86
    %v189 = vunpack.c.h.b16 %v86
    %v190 = vunpack.c.l.b16 %v87
    %v191 = vunpack.c.h.b16 %v87
    %v192 = vunpack.c.l.b16 %v88
    %v193 = vunpack.c.h.b16 %v88
    %v194 = vunpack.c.l.b16 %v89
    %v195 = vunpack.c.h.b16 %v89
    %v196 = vunpack.c.l.b16 %v90
    %v197 = vunpack.c.h.b16 %v90
    %v198 = vunpack.c.l.b16 %v91
    %v199 = vunpack.c.h.b16 %v91
    %v200 = vunpack.c.l.b16 %v92
    %v201 = vunpack.c.h.b16 %v92
    %v202 = vunpack.c.l.b16 %v93
    %v203 = vunpack.c.h.b16 %v93
    %v204 = vunpack.c.l.b16 %v94
    %v205 = vunpack.c.h.b16 %v94
    %v206 = vunpack.c.l.b16 %v95
    %v207 = vunpack.c.h.b16 %v95
    %v208 = vunpack.c.l.b16 %v96
    %v209 = vunpack.c.h.b16 %v96
    %v210 = vunpack.c.l.b16 %v97
    %v211 = vunpack.c.h.b16 %v97
    %v212 = vunpack.c.l.b16 %v98
    %v213 = vunpack.c.h.b16 %v98
    %v214 = vunpack.c.l.b16 %v99
    %v215 = vunpack.c.h.b16 %v99
    %v216 = vunpack.c.l.b16 %v100
    %v217 = vunpack.c.h.b16 %v100
    %v218 = vunpack.c.l.b16 %v101
    %v219 = vunpack.c.h.b16 %v101
    %v220 = vpack.c.b16 %v160, %v156
    %v221 = vpack.c.b16 %v161, %v157
    %v222 = vpack.c.b16 %v162, %v158
    %v223 = vpack.c.b16 %v163, %v159
    %v224 = vpack.c.b16 %v168, %v164
    %v225 = vpack.c.b16 %v169, %v165
    %v226 = vpack.c.b16 %v170, %v166
    %v227 = vpack.c.b16 %v171, %v167
    %v228 = vpack.c.b16 %v176, %v172
    %v229 = vpack.c.b16 %v177, %v173
    %v230 = vpack.c.b16 %v178, %v174
    %v231 = vpack.c.b16 %v179, %v175
    %v232 = vpack.c.b16 %v184, %v180
    %v233 = vpack.c.b16 %v185, %v181
    %v234 = vpack.c.b16 %v186, %v182
    %v235 = vpack.c.b16 %v187, %v183
    %v236 = vpack.c.b16 %v192, %v188
    %v237 = vpack.c.b16 %v193, %v189
    %v238 = vpack.c.b16 %v194, %v190
    %v239 = vpack.c.b16 %v195, %v191
    %v240 = vpack.c.b16 %v200, %v196
    %v241 = vpack.c.b16 %v201, %v197
    %v242 = vpack.c.b16 %v202, %v198
    %v243 = vpack.c.b16 %v203, %v199
    %v244 = vpack.c.b16 %v208, %v204
    %v245 = vpack.c.b16 %v209, %v205
    %v246 = vpack.c.b16 %v210, %v206
    %v247 = vpack.c.b16 %v211, %v207
    %v248 = vpack.c.b16 %v216, %v212
    %v249 = vpack.c.b16 %v217, %v213
    %v250 = vpack.c.b16 %v218, %v214
    %v251 = vpack.c.b16 %v219, %v215
    %284 = vmatprep.subr.bf16.mxu0 %v249
    %285 = vmatpush1.bf16.msra.mxu0 %v248
    %286 = vmatprep.subr.bf16.mxu0 %v245
    %287 = vmatpush1.bf16.msra.mxu0 %v244
    %288 = vmatprep.subr.bf16.mxu0 %v241
    %289 = vmatpush1.bf16.msra.mxu0 %v240
    %290 = vmatprep.subr.bf16.mxu0 %v237
    %291 = vmatpush1.bf16.msra.mxu0 %v236
    %292 = vmatprep.subr.bf16.mxu0 %v233
    %293 = vmatpush1.bf16.msra.mxu0 %v232
    %294 = vmatprep.subr.bf16.mxu0 %v229
    %295 = vmatpush1.bf16.msra.mxu0 %v228
    %296 = vmatprep.subr.bf16.mxu0 %v225
    %297 = vmatpush1.bf16.msra.mxu0 %v224
    %298 = vmatprep.subr.bf16.mxu0 %v221
    %299 = vmatpush1.bf16.msra.mxu0 %v220
    %300 = vmatprep.subr.bf16.mxu0 0
    %301 = vmatpush2.bf16.msra.mxu0 0
    %302 = vmatprep.subr.bf16.mxu0 0
    %303 = vmatpush2.bf16.msra.mxu0 0
    %304 = vmatprep.subr.bf16.mxu0 0
    %305 = vmatpush2.bf16.msra.mxu0 0
    %306 = vmatprep.subr.bf16.mxu0 0
    %307 = vmatpush2.bf16.msra.mxu0 0
    %308 = vmatprep.subr.bf16.mxu0 0
    %309 = vmatpush2.bf16.msra.mxu0 0
    %310 = vmatprep.subr.bf16.mxu0 0
    %311 = vmatpush2.bf16.msra.mxu0 0
    %312 = vmatprep.subr.bf16.mxu0 0
    %313 = vmatpush2.bf16.msra.mxu0 0
    %314 = vmatprep.subr.bf16.mxu0 0
    %315 = vmatpush2.bf16.msra.mxu0 0
    %316 = vmatprep.mubr.bf16.mxu0 0
    %317 = vmatmul.mubr.bf16.gmra.mxu0 %v69
    %v318 = vpop.f32.mrf.mxu0
    %v319 = vadd.f32 %v107, %v318
    %v320 = vpop.f32.mrf.mxu0
    %v321 = vadd.f32 %v111, %v320
    %v322 = vpop.f32.mrf.mxu0
    %v323 = vpop.f32.mrf.mxu0
    %324 = vdwg.mxu0
    %325 = vmatprep.subr.bf16.mxu0 %v251
    %326 = vmatpush1.bf16.msra.mxu0 %v250
    %327 = vmatprep.subr.bf16.mxu0 %v247
    %328 = vmatpush1.bf16.msra.mxu0 %v246
    %329 = vmatprep.subr.bf16.mxu0 %v243
    %330 = vmatpush1.bf16.msra.mxu0 %v242
    %331 = vmatprep.subr.bf16.mxu0 %v239
    %332 = vmatpush1.bf16.msra.mxu0 %v238
    %333 = vmatprep.subr.bf16.mxu0 %v235
    %334 = vmatpush1.bf16.msra.mxu0 %v234
    %335 = vmatprep.subr.bf16.mxu0 %v231
    %336 = vmatpush1.bf16.msra.mxu0 %v230
    %337 = vmatprep.subr.bf16.mxu0 %v227
    %338 = vmatpush1.bf16.msra.mxu0 %v226
    %339 = vmatprep.subr.bf16.mxu0 %v223
    %340 = vmatpush1.bf16.msra.mxu0 %v222
    %341 = vmatprep.subr.bf16.mxu0 0
    %342 = vmatpush2.bf16.msra.mxu0 0
    %343 = vmatprep.subr.bf16.mxu0 0
    %344 = vmatpush2.bf16.msra.mxu0 0
    %345 = vmatprep.subr.bf16.mxu0 0
    %346 = vmatpush2.bf16.msra.mxu0 0
    %347 = vmatprep.subr.bf16.mxu0 0
    %348 = vmatpush2.bf16.msra.mxu0 0
    %349 = vmatprep.subr.bf16.mxu0 0
    %350 = vmatpush2.bf16.msra.mxu0 0
    %351 = vmatprep.subr.bf16.mxu0 0
    %352 = vmatpush2.bf16.msra.mxu0 0
    %353 = vmatprep.subr.bf16.mxu0 0
    %354 = vmatpush2.bf16.msra.mxu0 0
    %355 = vmatprep.subr.bf16.mxu0 0
    %356 = vmatpush2.bf16.msra.mxu0 0
    %357 = vmatprep.mubr.bf16.mxu0 0
    %358 = vmatmul.mubr.bf16.gmra.mxu0 %v69
    %v359 = vpop.f32.mrf.mxu0
    %v360 = vadd.f32 %v115, %v359
    %v361 = vpop.f32.mrf.mxu0
    %v362 = vadd.f32 %v119, %v361
    %v363 = vpop.f32.mrf.mxu0
    %v364 = vpop.f32.mrf.mxu0
    %365 = vdwg.mxu0
    %vm366 = vcmp.ge.f32.partialorder %v319, 0.0
    %vm367 = vcmp.ge.f32.partialorder %v321, 0.0
    %vm368 = vcmp.ge.f32.partialorder %v360, 0.0
    %vm369 = vcmp.ge.f32.partialorder %v362, 0.0
    %v370 = vmul.f32 %v319, 0.22916667
    %v371 = vmul.f32 %v321, 0.22916667
    %v372 = vmul.f32 %v360, 0.22916667
    %v373 = vmul.f32 %v362, 0.22916667
    %v374 = vsel %vm366, %v319, %v370
    %v375 = vsel %vm367, %v321, %v371
    %v376 = vsel %vm368, %v360, %v372
    %v377 = vsel %vm369, %v362, %v373
    %v378 = vpack.c.bf16 %v374, %v374
    %v379 = vpack.c.bf16 %v375, %v375
    %v380 = vpack.c.bf16 %v376, %v376
    %v381 = vpack.c.bf16 %v377, %v377
    %v382 = vld [vmem:[#allocation5] sm:$0xff]
    %v383 = vld [vmem:[#allocation5 + $0x8] sm:$0xff]
    %v384 = vld [vmem:[#allocation5 + $0x10] sm:$0xff]
    %v385 = vld [vmem:[#allocation5 + $0x18] sm:$0xff]
    %v386 = vld [vmem:[#allocation5 + $0x20] sm:$0xff]
    %v387 = vld [vmem:[#allocation5 + $0x28] sm:$0xff]
    %v388 = vld [vmem:[#allocation5 + $0x30] sm:$0xff]
    %v389 = vld [vmem:[#allocation5 + $0x38] sm:$0xff]
    %v390 = vld [vmem:[#allocation5 + $0x40] sm:$0xff]
    %v391 = vld [vmem:[#allocation5 + $0x48] sm:$0xff]
    %v392 = vld [vmem:[#allocation5 + $0x50] sm:$0xff]
    %v393 = vld [vmem:[#allocation5 + $0x58] sm:$0xff]
    %v394 = vld [vmem:[#allocation5 + $0x60] sm:$0xff]
    %v395 = vld [vmem:[#allocation5 + $0x68] sm:$0xff]
    %v396 = vld [vmem:[#allocation5 + $0x70] sm:$0xff]
    %v397 = vld [vmem:[#allocation5 + $0x78] sm:$0xff]
    %v398 = vld [vmem:[#allocation5 + $0x80] sm:$0xff]
    %v399 = vld [vmem:[#allocation5 + $0x88] sm:$0xff]
    %v400 = vld [vmem:[#allocation5 + $0x90] sm:$0xff]
    %v401 = vld [vmem:[#allocation5 + $0x98] sm:$0xff]
    %v402 = vld [vmem:[#allocation5 + $0xa0] sm:$0xff]
    %v403 = vld [vmem:[#allocation5 + $0xa8] sm:$0xff]
    %v404 = vld [vmem:[#allocation5 + $0xb0] sm:$0xff]
    %v405 = vld [vmem:[#allocation5 + $0xb8] sm:$0xff]
    %v406 = vld [vmem:[#allocation5 + $0xc0] sm:$0xff]
    %v407 = vld [vmem:[#allocation5 + $0xc8] sm:$0xff]
    %v408 = vld [vmem:[#allocation5 + $0xd0] sm:$0xff]
    %v409 = vld [vmem:[#allocation5 + $0xd8] sm:$0xff]
    %v410 = vld [vmem:[#allocation5 + $0xe0] sm:$0xff]
    %v411 = vld [vmem:[#allocation5 + $0xe8] sm:$0xff]
    %v412 = vld [vmem:[#allocation5 + $0xf0] sm:$0xff]
    %v413 = vld [vmem:[#allocation5 + $0xf8] sm:$0xff]
    %v414 = vld [vmem:[#allocation5 + $0x100] sm:$0xff]
    %v415 = vld [vmem:[#allocation5 + $0x108] sm:$0xff]
    %v416 = vld [vmem:[#allocation5 + $0x110] sm:$0xff]
    %v417 = vld [vmem:[#allocation5 + $0x118] sm:$0xff]
    %v418 = vld [vmem:[#allocation5 + $0x120] sm:$0xff]
    %v419 = vld [vmem:[#allocation5 + $0x128] sm:$0xff]
    %v420 = vld [vmem:[#allocation5 + $0x130] sm:$0xff]
    %v421 = vld [vmem:[#allocation5 + $0x138] sm:$0xff]
    %v422 = vld [vmem:[#allocation5 + $0x140] sm:$0xff]
    %v423 = vld [vmem:[#allocation5 + $0x148] sm:$0xff]
    %v424 = vld [vmem:[#allocation5 + $0x150] sm:$0xff]
    %v425 = vld [vmem:[#allocation5 + $0x158] sm:$0xff]
    %v426 = vld [vmem:[#allocation5 + $0x160] sm:$0xff]
    %v427 = vld [vmem:[#allocation5 + $0x168] sm:$0xff]
    %v428 = vld [vmem:[#allocation5 + $0x170] sm:$0xff]
    %v429 = vld [vmem:[#allocation5 + $0x178] sm:$0xff]
    %v430 = vld [vmem:[#allocation5 + $0x180] sm:$0xff]
    %v431 = vld [vmem:[#allocation5 + $0x188] sm:$0xff]
    %v432 = vld [vmem:[#allocation5 + $0x190] sm:$0xff]
    %v433 = vld [vmem:[#allocation5 + $0x198] sm:$0xff]
    %v434 = vld [vmem:[#allocation5 + $0x1a0] sm:$0xff]
    %v435 = vld [vmem:[#allocation5 + $0x1a8] sm:$0xff]
    %v436 = vld [vmem:[#allocation5 + $0x1b0] sm:$0xff]
    %v437 = vld [vmem:[#allocation5 + $0x1b8] sm:$0xff]
    %v438 = vld [vmem:[#allocation5 + $0x1c0] sm:$0xff]
    %v439 = vld [vmem:[#allocation5 + $0x1c8] sm:$0xff]
    %v440 = vld [vmem:[#allocation5 + $0x1d0] sm:$0xff]
    %v441 = vld [vmem:[#allocation5 + $0x1d8] sm:$0xff]
    %v442 = vld [vmem:[#allocation5 + $0x1e0] sm:$0xff]
    %v443 = vld [vmem:[#allocation5 + $0x1e8] sm:$0xff]
    %v444 = vld [vmem:[#allocation5 + $0x1f0] sm:$0xff]
    %v445 = vld [vmem:[#allocation5 + $0x1f8] sm:$0xff]
    %v446 = vld [vmem:[%s4] sm:$0x3]
    %v448 = vlaneseq
    %v449 = vshrl.u32 %v448, 7
    %v450 = vsub.s32 0, %v449
    %v451 = vrot.slane %v446, %v450
    %v452 = vlaneseq
    %v453 = vshrl.u32 %v452, 7
    %v454 = vsub.s32 1, %v453
    %v455 = vrot.slane %v446, %v454
    %v522 = vunpack.c.l.b16 %v382
    %v523 = vunpack.c.h.b16 %v382
    %v524 = vunpack.c.l.b16 %v383
    %v525 = vunpack.c.h.b16 %v383
    %v526 = vunpack.c.l.b16 %v384
    %v527 = vunpack.c.h.b16 %v384
    %v528 = vunpack.c.l.b16 %v385
    %v529 = vunpack.c.h.b16 %v385
    %v530 = vunpack.c.l.b16 %v386
    %v531 = vunpack.c.h.b16 %v386
    %v532 = vunpack.c.l.b16 %v387
    %v533 = vunpack.c.h.b16 %v387
    %v534 = vunpack.c.l.b16 %v388
    %v535 = vunpack.c.h.b16 %v388
    %v536 = vunpack.c.l.b16 %v389
    %v537 = vunpack.c.h.b16 %v389
    %v538 = vunpack.c.l.b16 %v390
    %v539 = vunpack.c.h.b16 %v390
    %v540 = vunpack.c.l.b16 %v391
    %v541 = vunpack.c.h.b16 %v391
    %v542 = vunpack.c.l.b16 %v392
    %v543 = vunpack.c.h.b16 %v392
    %v544 = vunpack.c.l.b16 %v393
    %v545 = vunpack.c.h.b16 %v393
    %v546 = vunpack.c.l.b16 %v394
    %v547 = vunpack.c.h.b16 %v394
    %v548 = vunpack.c.l.b16 %v395
    %v549 = vunpack.c.h.b16 %v395
    %v550 = vunpack.c.l.b16 %v396
    %v551 = vunpack.c.h.b16 %v396
    %v552 = vunpack.c.l.b16 %v397
    %v553 = vunpack.c.h.b16 %v397
    %v554 = vunpack.c.l.b16 %v398
    %v555 = vunpack.c.h.b16 %v398
    %v556 = vunpack.c.l.b16 %v399
    %v557 = vunpack.c.h.b16 %v399
    %v558 = vunpack.c.l.b16 %v400
    %v559 = vunpack.c.h.b16 %v400
    %v560 = vunpack.c.l.b16 %v401
    %v561 = vunpack.c.h.b16 %v401
    %v562 = vunpack.c.l.b16 %v402
    %v563 = vunpack.c.h.b16 %v402
    %v564 = vunpack.c.l.b16 %v403
    %v565 = vunpack.c.h.b16 %v403
    %v566 = vunpack.c.l.b16 %v404
    %v567 = vunpack.c.h.b16 %v404
    %v568 = vunpack.c.l.b16 %v405
    %v569 = vunpack.c.h.b16 %v405
    %v570 = vunpack.c.l.b16 %v406
    %v571 = vunpack.c.h.b16 %v406
    %v572 = vunpack.c.l.b16 %v407
    %v573 = vunpack.c.h.b16 %v407
    %v574 = vunpack.c.l.b16 %v408
    %v575 = vunpack.c.h.b16 %v408
    %v576 = vunpack.c.l.b16 %v409
    %v577 = vunpack.c.h.b16 %v409
    %v578 = vunpack.c.l.b16 %v410
    %v579 = vunpack.c.h.b16 %v410
    %v580 = vunpack.c.l.b16 %v411
    %v581 = vunpack.c.h.b16 %v411
    %v582 = vunpack.c.l.b16 %v412
    %v583 = vunpack.c.h.b16 %v412
    %v584 = vunpack.c.l.b16 %v413
    %v585 = vunpack.c.h.b16 %v413
    %v586 = vunpack.c.l.b16 %v414
    %v587 = vunpack.c.h.b16 %v414
    %v588 = vunpack.c.l.b16 %v415
    %v589 = vunpack.c.h.b16 %v415
    %v590 = vunpack.c.l.b16 %v416
    %v591 = vunpack.c.h.b16 %v416
    %v592 = vunpack.c.l.b16 %v417
    %v593 = vunpack.c.h.b16 %v417
    %v594 = vunpack.c.l.b16 %v418
    %v595 = vunpack.c.h.b16 %v418
    %v596 = vunpack.c.l.b16 %v419
    %v597 = vunpack.c.h.b16 %v419
    %v598 = vunpack.c.l.b16 %v420
    %v599 = vunpack.c.h.b16 %v420
    %v600 = vunpack.c.l.b16 %v421
    %v601 = vunpack.c.h.b16 %v421
    %v602 = vunpack.c.l.b16 %v422
    %v603 = vunpack.c.h.b16 %v422
    %v604 = vunpack.c.l.b16 %v423
    %v605 = vunpack.c.h.b16 %v423
    %v606 = vunpack.c.l.b16 %v424
    %v607 = vunpack.c.h.b16 %v424
    %v608 = vunpack.c.l.b16 %v425
    %v609 = vunpack.c.h.b16 %v425
    %v610 = vunpack.c.l.b16 %v426
    %v611 = vunpack.c.h.b16 %v426
    %v612 = vunpack.c.l.b16 %v427
    %v613 = vunpack.c.h.b16 %v427
    %v614 = vunpack.c.l.b16 %v428
    %v615 = vunpack.c.h.b16 %v428
    %v616 = vunpack.c.l.b16 %v429
    %v617 = vunpack.c.h.b16 %v429
    %v618 = vunpack.c.l.b16 %v430
    %v619 = vunpack.c.h.b16 %v430
    %v620 = vunpack.c.l.b16 %v431
    %v621 = vunpack.c.h.b16 %v431
    %v622 = vunpack.c.l.b16 %v432
    %v623 = vunpack.c.h.b16 %v432
    %v624 = vunpack.c.l.b16 %v433
    %v625 = vunpack.c.h.b16 %v433
    %v626 = vunpack.c.l.b16 %v434
    %v627 = vunpack.c.h.b16 %v434
    %v628 = vunpack.c.l.b16 %v435
    %v629 = vunpack.c.h.b16 %v435
    %v630 = vunpack.c.l.b16 %v436
    %v631 = vunpack.c.h.b16 %v436
    %v632 = vunpack.c.l.b16 %v437
    %v633 = vunpack.c.h.b16 %v437
    %v634 = vunpack.c.l.b16 %v438
    %v635 = vunpack.c.h.b16 %v438
    %v636 = vunpack.c.l.b16 %v439
    %v637 = vunpack.c.h.b16 %v439
    %v638 = vunpack.c.l.b16 %v440
    %v639 = vunpack.c.h.b16 %v440
    %v640 = vunpack.c.l.b16 %v441
    %v641 = vunpack.c.h.b16 %v441
    %v642 = vunpack.c.l.b16 %v442
    %v643 = vunpack.c.h.b16 %v442
    %v644 = vunpack.c.l.b16 %v443
    %v645 = vunpack.c.h.b16 %v443
    %v646 = vunpack.c.l.b16 %v444
    %v647 = vunpack.c.h.b16 %v444
    %v648 = vunpack.c.l.b16 %v445
    %v649 = vunpack.c.h.b16 %v445
    %v650 = vpack.c.b16 %v524, %v522
    %v651 = vpack.c.b16 %v525, %v523
    %v652 = vpack.c.b16 %v528, %v526
    %v653 = vpack.c.b16 %v529, %v527
    %v654 = vpack.c.b16 %v532, %v530
    %v655 = vpack.c.b16 %v533, %v531
    %v656 = vpack.c.b16 %v536, %v534
    %v657 = vpack.c.b16 %v537, %v535
    %v658 = vpack.c.b16 %v540, %v538
    %v659 = vpack.c.b16 %v541, %v539
    %v660 = vpack.c.b16 %v544, %v542
    %v661 = vpack.c.b16 %v545, %v543
    %v662 = vpack.c.b16 %v548, %v546
    %v663 = vpack.c.b16 %v549, %v547
    %v664 = vpack.c.b16 %v552, %v550
    %v665 = vpack.c.b16 %v553, %v551
    %v666 = vpack.c.b16 %v556, %v554
    %v667 = vpack.c.b16 %v557, %v555
    %v668 = vpack.c.b16 %v560, %v558
    %v669 = vpack.c.b16 %v561, %v559
    %v670 = vpack.c.b16 %v564, %v562
    %v671 = vpack.c.b16 %v565, %v563
    %v672 = vpack.c.b16 %v568, %v566
    %v673 = vpack.c.b16 %v569, %v567
    %v674 = vpack.c.b16 %v572, %v570
    %v675 = vpack.c.b16 %v573, %v571
    %v676 = vpack.c.b16 %v576, %v574
    %v677 = vpack.c.b16 %v577, %v575
    %v678 = vpack.c.b16 %v580, %v578
    %v679 = vpack.c.b16 %v581, %v579
    %v680 = vpack.c.b16 %v584, %v582
    %v681 = vpack.c.b16 %v585, %v583
    %v682 = vpack.c.b16 %v588, %v586
    %v683 = vpack.c.b16 %v589, %v587
    %v684 = vpack.c.b16 %v592, %v590
    %v685 = vpack.c.b16 %v593, %v591
    %v686 = vpack.c.b16 %v596, %v594
    %v687 = vpack.c.b16 %v597, %v595
    %v688 = vpack.c.b16 %v600, %v598
    %v689 = vpack.c.b16 %v601, %v599
    %v690 = vpack.c.b16 %v604, %v602
    %v691 = vpack.c.b16 %v605, %v603
    %v692 = vpack.c.b16 %v608, %v606
    %v693 = vpack.c.b16 %v609, %v607
    %v694 = vpack.c.b16 %v612, %v610
    %v695 = vpack.c.b16 %v613, %v611
    %v696 = vpack.c.b16 %v616, %v614
    %v697 = vpack.c.b16 %v617, %v615
    %v698 = vpack.c.b16 %v620, %v618
    %v699 = vpack.c.b16 %v621, %v619
    %v700 = vpack.c.b16 %v624, %v622
    %v701 = vpack.c.b16 %v625, %v623
    %v702 = vpack.c.b16 %v628, %v626
    %v703 = vpack.c.b16 %v629, %v627
    %v704 = vpack.c.b16 %v632, %v630
    %v705 = vpack.c.b16 %v633, %v631
    %v706 = vpack.c.b16 %v636, %v634
    %v707 = vpack.c.b16 %v637, %v635
    %v708 = vpack.c.b16 %v640, %v638
    %v709 = vpack.c.b16 %v641, %v639
    %v710 = vpack.c.b16 %v644, %v642
    %v711 = vpack.c.b16 %v645, %v643
    %v712 = vpack.c.b16 %v648, %v646
    %v713 = vpack.c.b16 %v649, %v647
    %778 = vmatprep.subr.bf16.mxu0 %v665
    %779 = vmatpush1.bf16.msra.mxu0 %v664
    %780 = vmatprep.subr.bf16.mxu0 %v663
    %781 = vmatpush1.bf16.msra.mxu0 %v662
    %782 = vmatprep.subr.bf16.mxu0 %v661
    %783 = vmatpush1.bf16.msra.mxu0 %v660
    %784 = vmatprep.subr.bf16.mxu0 %v659
    %785 = vmatpush1.bf16.msra.mxu0 %v658
    %786 = vmatprep.subr.bf16.mxu0 %v657
    %787 = vmatpush1.bf16.msra.mxu0 %v656
    %788 = vmatprep.subr.bf16.mxu0 %v655
    %789 = vmatpush1.bf16.msra.mxu0 %v654
    %790 = vmatprep.subr.bf16.mxu0 %v653
    %791 = vmatpush1.bf16.msra.mxu0 %v652
    %792 = vmatprep.subr.bf16.mxu0 %v651
    %793 = vmatpush1.bf16.msra.mxu0 %v650
    %794 = vmatprep.subr.bf16.mxu0 %v681
    %795 = vmatpush2.bf16.msra.mxu0 %v680
    %796 = vmatprep.subr.bf16.mxu0 %v679
    %797 = vmatpush2.bf16.msra.mxu0 %v678
    %798 = vmatprep.subr.bf16.mxu0 %v677
    %799 = vmatpush2.bf16.msra.mxu0 %v676
    %800 = vmatprep.subr.bf16.mxu0 %v675
    %801 = vmatpush2.bf16.msra.mxu0 %v674
    %802 = vmatprep.subr.bf16.mxu0 %v673
    %803 = vmatpush2.bf16.msra.mxu0 %v672
    %804 = vmatprep.subr.bf16.mxu0 %v671
    %805 = vmatpush2.bf16.msra.mxu0 %v670
    %806 = vmatprep.subr.bf16.mxu0 %v669
    %807 = vmatpush2.bf16.msra.mxu0 %v668
    %808 = vmatprep.subr.bf16.mxu0 %v667
    %809 = vmatpush2.bf16.msra.mxu0 %v666
    %810 = vmatprep.mubr.bf16.mxu0 %v379
    %811 = vmatmul.mubr.bf16.gmra.mxu0 %v378
    %v812 = vpop.f32.mrf.mxu0
    %v813 = vadd.f32 %v451, %v812
    %v814 = vpop.f32.mrf.mxu0
    %v815 = vadd.f32 %v455, %v814
    %v816 = vpop.f32.mrf.mxu0
    %v817 = vpop.f32.mrf.mxu0
    %818 = vdwg.mxu0
    %819 = vmatprep.subr.bf16.mxu0 %v697
    %820 = vmatpush1.bf16.msra.mxu0 %v696
    %821 = vmatprep.subr.bf16.mxu0 %v695
    %822 = vmatpush1.bf16.msra.mxu0 %v694
    %823 = vmatprep.subr.bf16.mxu0 %v693
    %824 = vmatpush1.bf16.msra.mxu0 %v692
    %825 = vmatprep.subr.bf16.mxu0 %v691
    %826 = vmatpush1.bf16.msra.mxu0 %v690
    %827 = vmatprep.subr.bf16.mxu0 %v689
    %828 = vmatpush1.bf16.msra.mxu0 %v688
    %829 = vmatprep.subr.bf16.mxu0 %v687
    %830 = vmatpush1.bf16.msra.mxu0 %v686
    %831 = vmatprep.subr.bf16.mxu0 %v685
    %832 = vmatpush1.bf16.msra.mxu0 %v684
    %833 = vmatprep.subr.bf16.mxu0 %v683
    %834 = vmatpush1.bf16.msra.mxu0 %v682
    %835 = vmatprep.subr.bf16.mxu0 %v713
    %836 = vmatpush2.bf16.msra.mxu0 %v712
    %837 = vmatprep.subr.bf16.mxu0 %v711
    %838 = vmatpush2.bf16.msra.mxu0 %v710
    %839 = vmatprep.subr.bf16.mxu0 %v709
    %840 = vmatpush2.bf16.msra.mxu0 %v708
    %841 = vmatprep.subr.bf16.mxu0 %v707
    %842 = vmatpush2.bf16.msra.mxu0 %v706
    %843 = vmatprep.subr.bf16.mxu0 %v705
    %844 = vmatpush2.bf16.msra.mxu0 %v704
    %845 = vmatprep.subr.bf16.mxu0 %v703
    %846 = vmatpush2.bf16.msra.mxu0 %v702
    %847 = vmatprep.subr.bf16.mxu0 %v701
    %848 = vmatpush2.bf16.msra.mxu0 %v700
    %849 = vmatprep.subr.bf16.mxu0 %v699
    %850 = vmatpush2.bf16.msra.mxu0 %v698
    %851 = vmatprep.mubr.bf16.mxu0 %v381
    %852 = vmatmul.mubr.bf16.gmra.mxu0 %v380
    %v853 = vpop.f32.mrf.mxu0
    %v854 = vadd.f32 %v813, %v853
    %v855 = vpop.f32.mrf.mxu0
    %v856 = vadd.f32 %v815, %v855
    %v857 = vpop.f32.mrf.mxu0
    %v858 = vpop.f32.mrf.mxu0
    %859 = vdwg.mxu0
    %vm860 = vcmp.ge.f32.partialorder %v854, 0.0
    %vm861 = vcmp.ge.f32.partialorder %v856, 0.0
    %v862 = vmul.f32 %v854, 0.22916667
    %v863 = vmul.f32 %v856, 0.22916667
    %v864 = vsel %vm860, %v854, %v862
    %v865 = vsel %vm861, %v856, %v863
    %v866 = vpack.c.bf16 %v864, %v864
    %v867 = vpack.c.bf16 %v865, %v865
    %v868 = vld [vmem:[#allocation7] sm:$0xf]
    %v869 = vld [vmem:[#allocation7 + $0x4] sm:$0xf]
    %v870 = vld [vmem:[#allocation7 + $0x8] sm:$0xf]
    %v871 = vld [vmem:[#allocation7 + $0xc] sm:$0xf]
    %v872 = vld [vmem:[#allocation7 + $0x10] sm:$0xf]
    %v873 = vld [vmem:[#allocation7 + $0x14] sm:$0xf]
    %v874 = vld [vmem:[#allocation7 + $0x18] sm:$0xf]
    %v875 = vld [vmem:[#allocation7 + $0x1c] sm:$0xf]
    %v876 = vld [vmem:[#allocation7 + $0x20] sm:$0xf]
    %v877 = vld [vmem:[#allocation7 + $0x24] sm:$0xf]
    %v878 = vld [vmem:[#allocation7 + $0x28] sm:$0xf]
    %v879 = vld [vmem:[#allocation7 + $0x2c] sm:$0xf]
    %v880 = vld [vmem:[#allocation7 + $0x30] sm:$0xf]
    %v881 = vld [vmem:[#allocation7 + $0x34] sm:$0xf]
    %v882 = vld [vmem:[#allocation7 + $0x38] sm:$0xf]
    %v883 = vld [vmem:[#allocation7 + $0x3c] sm:$0xf]
    %v884 = vld [vmem:[#allocation7 + $0x40] sm:$0xf]
    %v885 = vld [vmem:[#allocation7 + $0x44] sm:$0xf]
    %v886 = vld [vmem:[#allocation7 + $0x48] sm:$0xf]
    %v887 = vld [vmem:[#allocation7 + $0x4c] sm:$0xf]
    %v888 = vld [vmem:[#allocation7 + $0x50] sm:$0xf]
    %v889 = vld [vmem:[#allocation7 + $0x54] sm:$0xf]
    %v890 = vld [vmem:[#allocation7 + $0x58] sm:$0xf]
    %v891 = vld [vmem:[#allocation7 + $0x5c] sm:$0xf]
    %v892 = vld [vmem:[#allocation7 + $0x60] sm:$0xf]
    %v893 = vld [vmem:[#allocation7 + $0x64] sm:$0xf]
    %v894 = vld [vmem:[#allocation7 + $0x68] sm:$0xf]
    %v895 = vld [vmem:[#allocation7 + $0x6c] sm:$0xf]
    %v896 = vld [vmem:[#allocation7 + $0x70] sm:$0xf]
    %v897 = vld [vmem:[#allocation7 + $0x74] sm:$0xf]
    %v898 = vld [vmem:[#allocation7 + $0x78] sm:$0xf]
    %v899 = vld [vmem:[#allocation7 + $0x7c] sm:$0xf]
    %v900 = vld [vmem:[%s6] sm:$0x1]
    %v902 = vlaneseq
    %v903 = vshrl.u32 %v902, 7
    %v904 = vsub.s32 0, %v903
    %v905 = vrot.slane %v900, %v904
    %v939 = vunpack.c.l.b16 %v868
    %v940 = vunpack.c.l.b16 %v869
    %v941 = vunpack.c.l.b16 %v870
    %v942 = vunpack.c.l.b16 %v871
    %v943 = vunpack.c.l.b16 %v872
    %v944 = vunpack.c.l.b16 %v873
    %v945 = vunpack.c.l.b16 %v874
    %v946 = vunpack.c.l.b16 %v875
    %v947 = vunpack.c.l.b16 %v876
    %v948 = vunpack.c.l.b16 %v877
    %v949 = vunpack.c.l.b16 %v878
    %v950 = vunpack.c.l.b16 %v879
    %v951 = vunpack.c.l.b16 %v880
    %v952 = vunpack.c.l.b16 %v881
    %v953 = vunpack.c.l.b16 %v882
    %v954 = vunpack.c.l.b16 %v883
    %v955 = vunpack.c.l.b16 %v884
    %v956 = vunpack.c.l.b16 %v885
    %v957 = vunpack.c.l.b16 %v886
    %v958 = vunpack.c.l.b16 %v887
    %v959 = vunpack.c.l.b16 %v888
    %v960 = vunpack.c.l.b16 %v889
    %v961 = vunpack.c.l.b16 %v890
    %v962 = vunpack.c.l.b16 %v891
    %v963 = vunpack.c.l.b16 %v892
    %v964 = vunpack.c.l.b16 %v893
    %v965 = vunpack.c.l.b16 %v894
    %v966 = vunpack.c.l.b16 %v895
    %v967 = vunpack.c.l.b16 %v896
    %v968 = vunpack.c.l.b16 %v897
    %v969 = vunpack.c.l.b16 %v898
    %v970 = vunpack.c.l.b16 %v899
    %v971 = vpack.c.b16 %v940, %v939
    %v972 = vpack.c.b16 %v942, %v941
    %v973 = vpack.c.b16 %v944, %v943
    %v974 = vpack.c.b16 %v946, %v945
    %v975 = vpack.c.b16 %v948, %v947
    %v976 = vpack.c.b16 %v950, %v949
    %v977 = vpack.c.b16 %v952, %v951
    %v978 = vpack.c.b16 %v954, %v953
    %v979 = vpack.c.b16 %v956, %v955
    %v980 = vpack.c.b16 %v958, %v957
    %v981 = vpack.c.b16 %v960, %v959
    %v982 = vpack.c.b16 %v962, %v961
    %v983 = vpack.c.b16 %v964, %v963
    %v984 = vpack.c.b16 %v966, %v965
    %v985 = vpack.c.b16 %v968, %v967
    %v986 = vpack.c.b16 %v970, %v969
    %1003 = vmatprep.subr.bf16.mxu0 0
    %1004 = vmatpush1.bf16.msra.mxu0 %v978
    %1005 = vmatprep.subr.bf16.mxu0 0
    %1006 = vmatpush1.bf16.msra.mxu0 %v977
    %1007 = vmatprep.subr.bf16.mxu0 0
    %1008 = vmatpush1.bf16.msra.mxu0 %v976
    %1009 = vmatprep.subr.bf16.mxu0 0
    %1010 = vmatpush1.bf16.msra.mxu0 %v975
    %1011 = vmatprep.subr.bf16.mxu0 0
    %1012 = vmatpush1.bf16.msra.mxu0 %v974
    %1013 = vmatprep.subr.bf16.mxu0 0
    %1014 = vmatpush1.bf16.msra.mxu0 %v973
    %1015 = vmatprep.subr.bf16.mxu0 0
    %1016 = vmatpush1.bf16.msra.mxu0 %v972
    %1017 = vmatprep.subr.bf16.mxu0 0
    %1018 = vmatpush1.bf16.msra.mxu0 %v971
    %1019 = vmatprep.subr.bf16.mxu0 0
    %1020 = vmatpush2.bf16.msra.mxu0 %v986
    %1021 = vmatprep.subr.bf16.mxu0 0
    %1022 = vmatpush2.bf16.msra.mxu0 %v985
    %1023 = vmatprep.subr.bf16.mxu0 0
    %1024 = vmatpush2.bf16.msra.mxu0 %v984
    %1025 = vmatprep.subr.bf16.mxu0 0
    %1026 = vmatpush2.bf16.msra.mxu0 %v983
    %1027 = vmatprep.subr.bf16.mxu0 0
    %1028 = vmatpush2.bf16.msra.mxu0 %v982
    %1029 = vmatprep.subr.bf16.mxu0 0
    %1030 = vmatpush2.bf16.msra.mxu0 %v981
    %1031 = vmatprep.subr.bf16.mxu0 0
    %1032 = vmatpush2.bf16.msra.mxu0 %v980
    %1033 = vmatprep.subr.bf16.mxu0 0
    %1034 = vmatpush2.bf16.msra.mxu0 %v979
    %1035 = vmatprep.mubr.bf16.mxu0 %v867
    %1036 = vmatmul.mubr.bf16.gmra.mxu0 %v866
    %v1037 = vpop.f32.mrf.mxu0
    %v1038 = vadd.f32 %v905, %v1037
    %v1039 = vpop.f32.mrf.mxu0
    %v1040 = vpop.f32.mrf.mxu0
    %v1041 = vpop.f32.mrf.mxu0
    %1042 = vdwg.mxu0
    %vm1043 = vcmp.ge.f32.partialorder %v1038, 0.0
    %v1044 = vmul.f32 %v1038, 0.22916667
    %v1045 = vsel %vm1043, %v1038, %v1044
    %1046 = vst [vmem:[#allocation8] sm:$0xff] %v1045
    // Predicated region
    $region42: #{_jit_forward.1} parent=1 // pred_check
      _
    $region43: #{_jit_forward.1} parent=1 // pred_check_branch
      %1048 = sbr.rel (0) target = $region45
    $region44: #{_jit_forward.1} parent=1 // pred_region
      %s1050 = ssub.s32 128, 128
      %1051 = vsyncadd [#allocation4], %s1050
      %s1053 = sshll.u32 [#allocation8], 4
      %s1054 = int_to_ptr.vmem [resolvable:$true] %s1053
      %1056 = dma.vmem_to_hbm [thread:$0]  %s1054, 128, %s7, [#allocation4]
    $region45: #{_jit_forward.1} parent=1 // pred_fallthru
      _
    // Predicated region
    $region46: #{_jit_forward.1} parent=1 // pred_check
      _
    $region47: #{_jit_forward.1} parent=1 // pred_check_branch
      %1058 = sbr.rel (0) target = $region49
    $region48: #{_jit_forward.1} parent=1 // pred_region
      %1059 = dma.done [#allocation4], 128
    $region49: #{_jit_forward.1} parent=1 // pred_fallthru
      _
    %1060 = vsyncpa [#allocation3], 1
    %1061 = vsyncpa [#allocation6], 1
    %1062 = vsyncpa [#allocation4], 1

</llo_original>
